<compile_context>
chip_gen: v5e
topology: v5e:2x2
jax: 0.10.0
libtpu: 0.0.40
codegen_flags: <defaults>
</compile_context>

<pallas_src>
import functools

import jax
import jax.numpy as jnp
import numpy as np
from jax import lax
from jax.experimental import pallas as pl
from jax.experimental.pallas import tpu as pltpu


# ---------------------------------------------------------------------------
# pltpu.roll direction probe (run once, cached) so lane shifts are correct
# regardless of the rotate convention of the installed JAX/Mosaic version.
# ---------------------------------------------------------------------------
@functools.lru_cache(maxsize=None)
def _roll_sign():
    def k(x_ref, o_ref):
        o_ref[...] = pltpu.roll(x_ref[...], 1, axis=1)

    x = jnp.broadcast_to(jnp.arange(128, dtype=jnp.float32)[None, :], (8, 128))
    y = pl.pallas_call(
        k,
        out_shape=jax.ShapeDtypeStruct((8, 128), jnp.float32),
        in_specs=[pl.BlockSpec(memory_space=pltpu.MemorySpace.VMEM)],
        out_specs=pl.BlockSpec(memory_space=pltpu.MemorySpace.VMEM),
    )(x)
    # np.roll semantics: y[:,1] == x[:,0] == 0 ; reverse rotation: y[:,1] == 2
    return 1 if float(y[0, 1]) < 0.5 else -1


def _shift_lanes(x, off, sign):
    """Return y with y[:, i] = x[:, (i + off) % n] (circular, lane axis)."""
    n = x.shape[-1]
    s = (-sign * off) % n
    if s == 0:
        return x
    return pltpu.roll(x, s, axis=x.ndim - 1)


# ---------------------------------------------------------------------------
# Single fused kernel: CA + SA attention (per batch, unrolled) then the
# conv1..conv4 (3x3 conv + BN(train stats) + ReLU) chain, all in VMEM.
# Activations live in a lane-dense (C, B*HW) layout (HW=256 -> unmasked
# 128-lane stores); o1..o3 never touch HBM.
# ---------------------------------------------------------------------------
def decoder_kernel(x_ref, h_ref, m_ref,
                   wq_ref, bq_ref, wk_ref, bk_ref, wv_ref, bv_ref, g_ref,
                   w1_ref, w2_ref, w3_ref, w4_ref, bnw_ref, bnb_ref,
                   o_ref,
                   a1s, a2s, h2s,
                   *, B, C, H, W, roll_sign):
    f32 = jnp.float32
    bf = jnp.bfloat16
    HW = H * W
    N = B * HW

    # ---------------- Phase 1: CA_Block + SA_Block (+ h_x multiply) ----------
    for b in range(B):                      # B is tiny -> unrolled Python loop
        x = x_ref[b]                         # (C, HW) f32
        h = h_ref[b]                         # (C, HW) f32
        m = jax.nn.sigmoid(m_ref[b])         # (1, HW)  mask_d = sigmoid(mask)
        xm = x * m
        xb = x.astype(bf)

        # ---- CA_Block (channel attention); energies kept in f32 ----
        e_c = lax.dot_general(xm, xm, (((1,), (1,)), ((), ())),
                              preferred_element_type=f32)            # (C, C)
        e_c = e_c - jnp.max(e_c, axis=-1, keepdims=True)
        p_c = jnp.exp(e_c)
        att_c = p_c * pl.reciprocal(jnp.sum(p_c, axis=-1, keepdims=True),
                                    approx=True)
        o_c = jnp.dot(att_c.astype(bf), xb, preferred_element_type=f32)  # (C, HW)

        # ---- SA_Block (spatial attention) ----
        q = jnp.dot(wq_ref[...], x, preferred_element_type=f32) + bq_ref[...]
        k = jnp.dot(wk_ref[...], x, preferred_element_type=f32) + bk_ref[...]
        v = jnp.dot(wv_ref[...], xb, preferred_element_type=f32) + bv_ref[...]
        qm = q * m
        km = k * m
        e_s = lax.dot_general(qm, km, (((0,), (0,)), ((), ())),
                              preferred_element_type=f32)            # (HW, HW)
        e_s = e_s - jnp.max(e_s, axis=-1, keepdims=True)
        p_s = jnp.exp(e_s)
        att_s = p_s * pl.reciprocal(jnp.sum(p_s, axis=-1, keepdims=True),
                                    approx=True)
        # o_s[c, i] = sum_j v[c, j] * att_s[i, j]
        o_s = lax.dot_general(v.astype(bf), att_s.astype(bf),
                              (((1,), (1,)), ((), ())),
                              preferred_element_type=f32)            # (C, HW)

        sl = slice(b * HW, (b + 1) * HW)     # lane-aligned static slice
        a1s[:, sl] = h * (g_ref[0] * o_c + x)    # h_x * CA output
        a2s[:, sl] = h * (g_ref[1] * o_s + x)    # h_x * SA output
        h2s[:, sl] = h                            # h_x in (C, B*HW) layout

    # ---------------- Phase 2: fused conv1..conv4 chain ----------------------
    # Tap-validity masks built ONCE (reused by all four convs).
    pos = lax.broadcasted_iota(jnp.int32, (1, N), 1) % HW
    hh = pos // W
    ww = pos % W
    tap_ok = []
    for kh in (-1, 0, 1):
        for kw in (-1, 0, 1):
            tap_ok.append((hh + kh >= 0) & (hh + kh < H) &
                          (ww + kw >= 0) & (ww + kw < W))

    zero_bf = jnp.zeros((), bf)

    def conv_bn_relu(x, w_ref, idx):
        # x: (Cin, N) f32.  3x3 "same" conv as 9 small bf16 MXU matmuls
        # (one per tap) accumulated in f32; each tap is a bf16 lane shift
        # (pltpu.roll) + edge mask, so no explicit padding or im2col concat.
        xb16 = x.astype(bf)                     # cast once, shift/mask in bf16
        acc = None
        t = 0
        for kh in (-1, 0, 1):
            for kw in (-1, 0, 1):
                off = kh * W + kw
                ts = _shift_lanes(xb16, off, roll_sign)
                tap = jnp.where(tap_ok[t], ts, zero_bf)
                y = jnp.dot(w_ref[t], tap, preferred_element_type=jnp.float32)
                acc = y if acc is None else acc + y
                t += 1
        # BatchNorm2d training-mode: biased stats over (B,H,W) == lane axis.
        # Single-pass sum / sum-of-squares, f32 accumulation, var clamped >= 0.
        inv_n = 1.0 / N
        mean = jnp.sum(acc, axis=1, keepdims=True) * inv_n
        var = jnp.maximum(
            jnp.sum(acc * acc, axis=1, keepdims=True) * inv_n - mean * mean, 0.0)
        scale = lax.rsqrt(var + 1e-5) * bnw_ref[:, idx:idx + 1]
        y = (acc - mean) * scale + bnb_ref[:, idx:idx + 1]
        return jnp.maximum(y, 0.0)              # ReLU

    o1 = conv_bn_relu(a1s[...], w1_ref, 0)
    o2 = conv_bn_relu(a2s[...], w2_ref, 1)
    o3 = conv_bn_relu(jnp.concatenate([o1, o2], axis=0), w3_ref, 2)
    o4 = conv_bn_relu(o3 + h2s[...], w4_ref, 3)

    for b in range(B):                           # write back in (B, C, HW)
        o_ref[b] = o4[:, b * HW:(b + 1) * HW]


# ---------------------------------------------------------------------------
# Wrapper: single gridless pallas_call; only free reshapes in XLA.
# ---------------------------------------------------------------------------
def decoder_pallas(x3, h3, m3, p, *, H, W, roll_sign):
    B, C, HW = x3.shape
    N = B * HW
    bf = jnp.bfloat16
    f32 = jnp.float32

    def w9(w):   # OIHW (Cout, Cin, 3, 3) -> (9, Cout, Cin), t = kh*3 + kw
        co, ci = w.shape[0], w.shape[1]
        return w.transpose(2, 3, 0, 1).reshape(9, co, ci).astype(bf)

    bn_w = jnp.stack([p["conv1"]["gamma"], p["conv2"]["gamma"],
                      p["conv3"]["gamma"], p["conv4"]["gamma"]], axis=1)  # (C,4)
    bn_b = jnp.stack([p["conv1"]["beta"], p["conv2"]["beta"],
                      p["conv3"]["beta"], p["conv4"]["beta"]], axis=1)    # (C,4)

    vmem = pl.BlockSpec(memory_space=pltpu.MemorySpace.VMEM)
    smem = pl.BlockSpec(memory_space=pltpu.MemorySpace.SMEM)

    kern = functools.partial(decoder_kernel, B=B, C=C, H=H, W=W,
                             roll_sign=roll_sign)
    return pl.pallas_call(
        kern,
        out_shape=jax.ShapeDtypeStruct((B, C, HW), f32),
        in_specs=[vmem, vmem, vmem,                       # x, h, mask
                  vmem, vmem, vmem, vmem, vmem, vmem,     # wq,bq,wk,bk,wv,bv
                  smem,                                   # gammas (2,)
                  vmem, vmem, vmem, vmem,                 # conv weights (9,Co,Ci)
                  vmem, vmem],                            # bn gamma/beta (C,4)
        out_specs=vmem,
        scratch_shapes=[pltpu.VMEM((C, N), f32),          # h_x*CA  (C, B*HW)
                        pltpu.VMEM((C, N), f32),          # h_x*SA
                        pltpu.VMEM((C, N), f32)],         # h_x re-layout
    )(x3, h3, m3,
      p["wq"], p["bq"], p["wk"], p["bk"], p["wv"].astype(bf), p["bv"],
      p["gammas"],
      w9(p["conv1"]["w"]), w9(p["conv2"]["w"]),
      w9(p["conv3"]["w"]), w9(p["conv4"]["w"]),
      bn_w, bn_b)


def decoder_forward(cur_x, h_x, mask, params):
    return _decoder_jit(cur_x, h_x, mask, params, _roll_sign())


@functools.partial(jax.jit, static_argnums=(4,))
def _decoder_jit(cur_x, h_x, mask, params, roll_sign):
    B, C, H, W = cur_x.shape
    HW = H * W
    x3 = cur_x.reshape(B, C, HW)
    h3 = h_x.reshape(B, C, HW)
    m3 = mask.reshape(B, 1, HW)
    out = decoder_pallas(x3, h3, m3, params, H=H, W=W, roll_sign=roll_sign)
    return out.reshape(B, C, H, W)


# ---------------------------------------------------------------------------
# Pure-JAX f32 reference (PyTorch forward semantics) for correctness check
# ---------------------------------------------------------------------------
def convbr_ref(x_nchw, wp):
    y = lax.conv_general_dilated(x_nchw, wp["w"], (1, 1), "SAME",
                                 dimension_numbers=("NCHW", "OIHW", "NCHW"))
    mean = y.mean(axis=(0, 2, 3), keepdims=True)
    var = ((y - mean) ** 2).mean(axis=(0, 2, 3), keepdims=True)
    y = (y - mean) * lax.rsqrt(var + 1e-5)
    y = y * wp["gamma"].reshape(1, -1, 1, 1) + wp["beta"].reshape(1, -1, 1, 1)
    return jnp.maximum(y, 0.0)


def decoder_ref(cur_x, h_x, mask, p):
    B, C, H, W = cur_x.shape
    HW = H * W
    x = cur_x.reshape(B, C, HW)
    m = jax.nn.sigmoid(mask.reshape(B, 1, HW))

    xm = x * m
    e_ca = jnp.einsum("bci,bdi->bcd", xm, xm)
    a_ca = jax.nn.softmax(e_ca, axis=-1)
    oca = p["gammas"][0] * jnp.einsum("bcd,bdi->bci", a_ca, x) + x

    q = jnp.einsum("oc,bci->boi", p["wq"], x) + p["bq"].reshape(1, -1, 1)
    k = jnp.einsum("oc,bci->boi", p["wk"], x) + p["bk"].reshape(1, -1, 1)
    v = jnp.einsum("oc,bci->boi", p["wv"], x) + p["bv"].reshape(1, -1, 1)
    qm, km = q * m, k * m
    e_sa = jnp.einsum("boi,boj->bij", qm, km)
    a_sa = jax.nn.softmax(e_sa, axis=-1)
    osa = p["gammas"][1] * jnp.einsum("bcj,bij->bci", v, a_sa) + x

    oca = oca.reshape(B, C, H, W)
    osa = osa.reshape(B, C, H, W)
    o1 = convbr_ref(h_x * oca, p["conv1"])
    o2 = convbr_ref(h_x * osa, p["conv2"])
    o3 = convbr_ref(jnp.concatenate([o1, o2], axis=1), p["conv3"])
    o4 = convbr_ref(o3 + h_x, p["conv4"])
    return o4


# ---------------------------------------------------------------------------
# Deterministic parameter init
# ---------------------------------------------------------------------------
def conv_params(key, cin, cout):
    std = 1.0 / float(np.sqrt(cin * 9))            # kaiming_normal_(a=1): gain=1
    w = jax.random.normal(key, (cout, cin, 3, 3), jnp.float32) * std   # OIHW
    return dict(w=w,
                gamma=jnp.ones((cout,), jnp.float32),
                beta=jnp.zeros((cout,), jnp.float32))


def init_params(key, C):
    ks = jax.random.split(key, 7)
    p = {
        "wq": jax.random.normal(ks[0], (C // 8, C), jnp.float32) / np.sqrt(C),
        "bq": jax.random.normal(ks[1], (C // 8, 1), jnp.float32) * 0.01,
        "wk": jax.random.normal(ks[2], (C // 8, C), jnp.float32) / np.sqrt(C),
        "bk": jax.random.normal(ks[3], (C // 8, 1), jnp.float32) * 0.01,
        "wv": jax.random.normal(ks[4], (C, C), jnp.float32) / np.sqrt(C),
        "bv": jax.random.normal(ks[5], (C, 1), jnp.float32) * 0.01,
        "gammas": jnp.ones((2,), jnp.float32),     # (gamma_CA, gamma_SA)
    }
    ck = jax.random.split(ks[6], 4)
    p["conv1"] = conv_params(ck[0], C, C)
    p["conv2"] = conv_params(ck[1], C, C)
    p["conv3"] = conv_params(ck[2], 2 * C, C)
    p["conv4"] = conv_params(ck[3], C, C)
    return p


if __name__ == "__main__":
    B, C, H, W = 2, 16, 16, 16
    key = jax.random.PRNGKey(0)
    k1, k2, k3, k4 = jax.random.split(key, 4)

    cur_x = jax.random.normal(k1, (B, C, H, W), jnp.float32)
    h_x = jax.random.normal(k2, (B, C, H, W), jnp.float32)
    mask = jax.random.normal(k3, (B, 1, H, W), jnp.float32)
    params = init_params(k4, C)

    out = jax.block_until_ready(decoder_forward(cur_x, h_x, mask, params))
    ref = jax.block_until_ready(decoder_ref(cur_x, h_x, mask, params))
    assert out.shape == (B, C, H, W)
    # Tolerance loosened vs an all-f32 kernel because the heavy matmuls use
    # bf16 MXU operands (f32 accumulation) and softmax denominators use the
    # EUP approximate reciprocal.
    np.testing.assert_allclose(np.asarray(out), np.asarray(ref), rtol=2e-2, atol=2e-2)

    print("KERNEL_OK")
</pallas_src>

<mosaic_0001>
module attributes {stable_mosaic.version = 11 : i64} {
  func.func @k(%arg0: memref<8x128xf32, #tpu.memory_space<vmem>>, %arg1: memref<8x128xf32, #tpu.memory_space<vmem>>) attributes {dimension_semantics = [], scalar_prefetch = 0 : i64, scratch_operands = 0 : i64, tpu.core_type = #tpu.core_type<tc>} {
    %c0 = arith.constant 0 : index
    %c0_0 = arith.constant 0 : index
    %0 = vector.load %arg0[%c0, %c0_0] : memref<8x128xf32, #tpu.memory_space<vmem>>, vector<8x128xf32>
    %c1_i32 = arith.constant 1 : i32
    %1 = tpu.dynamic_rotate %0 by %c1_i32 dim 1 : vector<8x128xf32>, i32 -> vector<8x128xf32>
    %c0_1 = arith.constant 0 : index
    %c0_2 = arith.constant 0 : index
    %2 = vector.load %arg1[%c0_1, %c0_2] : memref<8x128xf32, #tpu.memory_space<vmem>>, vector<8x128xf32>
    tpu.vector_store %arg1[%c0_1, %c0_2], %1 {strides = array<i32>} : memref<8x128xf32, #tpu.memory_space<vmem>>, vector<8x128xf32>,
    return
  }
}

</mosaic_0001>

<llo_original>
// kernel: tpu_custom_call.1
$region0: #{tpu_custom_call.1}
  #allocation0 [shape = 'u32[]', space=smem, size = 0x4, offset = 0x4, fixed_abs, tag = 'smem constant byte address 0x4 - core index']
  #allocation1 [shape = 'u32[72,128]{1,0:T(1,128)}', space=vmem, size = 0x9000, scoped, tag = 'internal scratch']
  %s0 = inlined_call_operand.hbm [shape: f32[8,128], index: 0, kind: input, shape index: {}]
  %s1 = inlined_call_operand.hbm [shape: f32[8,128], index: 1, kind: output, shape index: {}]
  %s2 = sld [smem:[#allocation0]]
  $region18: #{tpu_custom_call.1} parent=0
    _
  %s4 = ssub.s32 1, %s2
  %s5 = scalar_select 0, %s4, %s2
  $region1: #{tpu_custom_call.1} parent=0
    #allocation2 [shape = 'u8[4096]{0}', space=vmem, size = 0x1000, scoped, tag = 'input window, operand 0, single buffered']
    #allocation3 [shape = 's32[1]{0}', space=sflag, size = 0x4, scoped, tag = 'scoped memory for tpu_custom_call.1']
    #allocation4 [shape = 's32[1]{0}', space=sflag, size = 0x4, scoped, tag = 'scoped memory for tpu_custom_call.1']
    #allocation5 [shape = 'u8[4096]{0}', space=vmem, size = 0x1000, scoped, tag = 'output window, operand 0, single buffered']
    %6 = vsyncpa [#allocation3], 0
    %7 = vsyncpa [#allocation4], 0
    // Predicated region
    $region2: #{tpu_custom_call.1} parent=1 // pred_check
      _
    $region3: #{tpu_custom_call.1} parent=1 // pred_check_branch
      %9 = sbr.rel (0) target = $region5
    $region4: #{tpu_custom_call.1} parent=1 // pred_region
      %11 = vsyncadd [#allocation3], 0
      %s13 = sshll.u32 %s0, 4
      %s14 = int_to_ptr.hbm [resolvable:$true] %s13
      %s15 = sshll.u32 [#allocation2], 4
      %s16 = int_to_ptr.vmem [resolvable:$true] %s15
      %18 = dma.hbm_to_vmem [thread:$0]  %s14, 128, %s16, [#allocation3]
    $region5: #{tpu_custom_call.1} parent=1 // pred_fallthru
      _
    // Predicated region
    $region6: #{tpu_custom_call.1} parent=1 // pred_check
      _
    $region7: #{tpu_custom_call.1} parent=1 // pred_check_branch
      %20 = sbr.rel (0) target = $region9
    $region8: #{tpu_custom_call.1} parent=1 // pred_region
      %22 = dma.done [#allocation3], 128
    $region9: #{tpu_custom_call.1} parent=1 // pred_fallthru
      _
    %v23 = vld [vmem:[#allocation2] sm:$0xff]
    %24 = vrot.lane.b32.xlu0 %v23, 1
    %v25 = vpop.permute.xlu0 %24
    %26 = vst [vmem:[#allocation5] sm:$0xff] %v25
    // Predicated region
    $region10: #{tpu_custom_call.1} parent=1 // pred_check
      _
    $region11: #{tpu_custom_call.1} parent=1 // pred_check_branch
      %28 = sbr.rel (0) target = $region13
    $region12: #{tpu_custom_call.1} parent=1 // pred_region
      %30 = vsyncadd [#allocation4], 0
      %s32 = sshll.u32 [#allocation5], 4
      %s33 = int_to_ptr.vmem [resolvable:$true] %s32
      %s34 = sshll.u32 %s1, 4
      %s35 = int_to_ptr.hbm [resolvable:$true] %s34
      %37 = dma.vmem_to_hbm [thread:$0]  %s33, 128, %s35, [#allocation4]
    $region13: #{tpu_custom_call.1} parent=1 // pred_fallthru
      _
    // Predicated region
    $region14: #{tpu_custom_call.1} parent=1 // pred_check
      _
    $region15: #{tpu_custom_call.1} parent=1 // pred_check_branch
      %39 = sbr.rel (0) target = $region17
    $region16: #{tpu_custom_call.1} parent=1 // pred_region
      %41 = dma.done [#allocation4], 128
    $region17: #{tpu_custom_call.1} parent=1 // pred_fallthru
      _
    %42 = vsyncpa [#allocation3], 1
    %43 = vsyncpa [#allocation4], 1

</llo_original>
